<compile_context>
chip_gen: v5e
topology: v5e:2x2
jax: 0.10.0
libtpu: 0.0.40
codegen_flags: <defaults>
</compile_context>

<pallas_src>
import functools

import jax
import jax.numpy as jnp
from jax.experimental import pallas as pl
from jax.experimental.pallas import tpu as pltpu


def _round_up(x: int, m: int) -> int:
    return ((x + m - 1) // m) * m


def _mlp_fused_kernel(x_ref, w_ref, b_ref, o_ref, *, num_layers: int,
                      use_bf16_matmul: bool):
    """x_ref: (TM, Dmax) row tile.  w_ref: (L, Dmax, Dmax) resident weights.
    b_ref: (L, 1, Dmax) resident biases.  o_ref: (TM, Dmax) lane-dense output.

    Intermediate activations stay as f32 values (vregs/VMEM), never HBM.
    """
    h = x_ref[...].astype(jnp.float32)
    for i in range(num_layers):
        w = w_ref[i]                       # (Dmax, Dmax), static slice
        b = b_ref[i].astype(jnp.float32)   # (1, Dmax) -> broadcasts
        if use_bf16_matmul:
            # Native single-pass MXU path on v6e/v7x; accumulate in f32.
            lhs = h.astype(jnp.bfloat16)
            rhs = w.astype(jnp.bfloat16)
        else:
            lhs = h
            rhs = w.astype(jnp.float32)
        h = jnp.dot(lhs, rhs, preferred_element_type=jnp.float32) + b
        if i < num_layers - 1:
            # LeakyReLU(0.2): max(h, 0.2*h) — single VALU max, f32 on the VPU.
            h = jnp.maximum(h, jnp.float32(0.2) * h)
    o_ref[...] = h.astype(o_ref.dtype)


@functools.partial(jax.jit,
                   static_argnames=("out_dim", "block_rows", "use_bf16_matmul"))
def mlp_forward(x, w_packed, b_packed, *, out_dim: int, block_rows: int = 512,
                use_bf16_matmul: bool = False):
    """Fused MLP forward: one pallas_call, row-tiled grid, resident weights."""
    batch, in_dim = x.shape
    num_layers, d_max, _ = w_packed.shape
    assert block_rows % 8 == 0

    tm = min(block_rows, _round_up(batch, 8))
    b_pad = _round_up(batch, tm)
    # Zero-pad rows to a tile multiple and columns to Dmax (padded columns
    # remain exactly 0 through every layer, see packing invariant).
    x_pad = jnp.pad(x, ((0, b_pad - batch), (0, d_max - in_dim)))

    kernel = functools.partial(_mlp_fused_kernel, num_layers=num_layers,
                               use_bf16_matmul=use_bf16_matmul)

    out_pad = pl.pallas_call(
        kernel,
        out_shape=jax.ShapeDtypeStruct((b_pad, d_max), x.dtype),
        grid=(b_pad // tm,),
        in_specs=[
            # Row tiles of x stream through the pipeline.
            pl.BlockSpec((tm, d_max), lambda i: (i, 0)),
            # Weights / biases: same block every grid step -> DMA'd once,
            # stay resident in VMEM across all row tiles.
            pl.BlockSpec((num_layers, d_max, d_max), lambda i: (0, 0, 0)),
            pl.BlockSpec((num_layers, 1, d_max), lambda i: (0, 0, 0)),
        ],
        out_specs=pl.BlockSpec((tm, d_max), lambda i: (i, 0)),
        compiler_params=pltpu.CompilerParams(
            dimension_semantics=("parallel",)),
    )(x_pad, w_packed, b_packed)

    return out_pad[:batch, :out_dim]


def init_mlp_params(key, input_dim, l_hidden, output_dim, dtype=jnp.float32):
    """Deterministic init matching nn.Linear's default U(-1/sqrt(fan_in), ...).

    Weights are stored as (in, out) — transposed relative to PyTorch's
    (out, in); biases as (out,).
    """
    l_neurons = list(l_hidden) + [output_dim]
    params = []
    prev = input_dim
    for n_out in l_neurons:
        key, kw, kb = jax.random.split(key, 3)
        bound = 1.0 / jnp.sqrt(jnp.float32(prev))
        w = jax.random.uniform(kw, (prev, n_out), dtype, -bound, bound)
        b = jax.random.uniform(kb, (n_out,), dtype, -bound, bound)
        params.append((w, b))
        prev = n_out
    return params


def pack_mlp_params(params, weight_dtype=None):
    """Pack per-layer (w, b) into two contiguous zero-padded buffers.

    Dmax = max layer width rounded up to 128 (lane-dense, (8,128)-aligned).
    Zero padding preserves exact numerics: padded rows multiply zero
    activations and padded columns get zero bias, so they stay 0.
    """
    dims = [params[0][0].shape[0]] + [w.shape[1] for w, _ in params]
    d_max = _round_up(max(dims), 128)
    num_layers = len(params)
    wd = weight_dtype if weight_dtype is not None else params[0][0].dtype

    w_packed = jnp.zeros((num_layers, d_max, d_max), wd)
    b_packed = jnp.zeros((num_layers, 1, d_max), jnp.float32)
    for i, (w, b) in enumerate(params):
        k, n = w.shape
        w_packed = w_packed.at[i, :k, :n].set(w.astype(wd))
        b_packed = b_packed.at[i, 0, :n].set(b.reshape(-1).astype(jnp.float32))
    return w_packed, b_packed


def mlp_forward_ref(x, params):
    """Pure-JAX reference for correctness checking."""
    n_layers = len(params)
    h = x.astype(jnp.float32)
    for i, (w, b) in enumerate(params):
        h = jnp.dot(h, w.astype(jnp.float32),
                    preferred_element_type=jnp.float32) + b.astype(jnp.float32)
        if i < n_layers - 1:
            h = jnp.where(h > 0, h, 0.2 * h)
    return h.astype(x.dtype)


if __name__ == "__main__":
    key = jax.random.PRNGKey(0)

    input_dim = 32
    l_hidden = [64, 48]
    output_dim = 16
    batch = 8

    kx, kp, kx2 = jax.random.split(key, 3)
    params = init_mlp_params(kp, input_dim, l_hidden, output_dim)
    w_packed, b_packed = pack_mlp_params(params)

    # Small, latency-bound case (single row tile, grid=(1,)).
    x = jax.random.normal(kx, (batch, input_dim), jnp.float32)
    out = jax.block_until_ready(
        mlp_forward(x, w_packed, b_packed, out_dim=output_dim))
    ref = mlp_forward_ref(x, params)
    assert out.shape == (batch, output_dim)
    assert jnp.allclose(out, ref, atol=1e-4, rtol=1e-4)

    # Multi-tile grid: weights stay resident across row tiles.
    x_big = jax.random.normal(kx2, (600, input_dim), jnp.float32)
    out_big = jax.block_until_ready(
        mlp_forward(x_big, w_packed, b_packed, out_dim=output_dim,
                    block_rows=256))
    ref_big = mlp_forward_ref(x_big, params)
    assert jnp.allclose(out_big, ref_big, atol=1e-4, rtol=1e-4)

    # bf16 MXU-operand path (native on v6e/v7x); f32 accumulation, looser tol.
    out_bf16 = jax.block_until_ready(
        mlp_forward(x_big, w_packed, b_packed, out_dim=output_dim,
                    block_rows=256, use_bf16_matmul=True))
    assert jnp.allclose(out_bf16, ref_big, atol=5e-2, rtol=5e-2)

    print("KERNEL_OK")
</pallas_src>

<mosaic_0001>
module attributes {stable_mosaic.version = 11 : i64} {
  func.func @_mlp_fused_kernel(%arg0: i32, %arg1: memref<8x128xf32, #tpu.memory_space<vmem>>, %arg2: memref<3x128x128xf32, #tpu.memory_space<vmem>>, %arg3: memref<3x1x128xf32, #tpu.memory_space<vmem>>, %arg4: memref<8x128xf32, #tpu.memory_space<vmem>>) attributes {dimension_semantics = [#tpu.dimension_semantics<parallel>], iteration_bounds = array<i64: 1>, scalar_prefetch = 0 : i64, scratch_operands = 0 : i64, tpu.core_type = #tpu.core_type<tc>, window_params = [{transform_indices = @transform_0, window_bounds = array<i64: 8, 128>}, {pipeline_mode = #tpu.pipeline_mode<synchronous>, transform_indices = @transform_1, window_bounds = array<i64: 3, 128, 128>}, {pipeline_mode = #tpu.pipeline_mode<synchronous>, transform_indices = @transform_2, window_bounds = array<i64: 3, 1, 128>}, {transform_indices = @transform_3, window_bounds = array<i64: 8, 128>}]} {
    %c0 = arith.constant 0 : index
    %c0_0 = arith.constant 0 : index
    %0 = vector.load %arg1[%c0, %c0_0] : memref<8x128xf32, #tpu.memory_space<vmem>>, vector<8x128xf32>
    %c0_1 = arith.constant 0 : index
    %c0_2 = arith.constant 0 : index
    %c0_3 = arith.constant 0 : index
    %1 = vector.load %arg2[%c0_1, %c0_2, %c0_3] : memref<3x128x128xf32, #tpu.memory_space<vmem>>, vector<1x128x128xf32>
    %2 = vector.shape_cast %1 : vector<1x128x128xf32> to vector<128x128xf32>
    %c0_4 = arith.constant 0 : index
    %c0_5 = arith.constant 0 : index
    %c0_6 = arith.constant 0 : index
    %3 = vector.load %arg3[%c0_4, %c0_5, %c0_6] : memref<3x1x128xf32, #tpu.memory_space<vmem>>, vector<1x1x128xf32>
    %4 = vector.shape_cast %3 : vector<1x1x128xf32> to vector<1x128xf32>
    %cst = arith.constant dense<0.000000e+00> : vector<8x128xf32>
    %5 = tpu.matmul %0, %2, %cst {dimension_numbers = #tpu.dot_dimension_numbers<[1], [0], [0], [1], [0, 0, 1, 1], [], []>} : vector<8x128xf32>, vector<128x128xf32>, vector<8x128xf32> -> vector<8x128xf32>
    %6 = vector.broadcast %4 : vector<1x128xf32> to vector<8x128xf32>
    %7 = arith.addf %5, %6 : vector<8x128xf32>
    %cst_7 = arith.constant 2.000000e-01 : f32
    %8 = vector.broadcast %cst_7 : f32 to vector<8x128xf32>
    %9 = arith.mulf %8, %7 : vector<8x128xf32>
    %10 = arith.maximumf %7, %9 : vector<8x128xf32>
    %c1 = arith.constant 1 : index
    %c0_8 = arith.constant 0 : index
    %c0_9 = arith.constant 0 : index
    %11 = vector.load %arg2[%c1, %c0_8, %c0_9] : memref<3x128x128xf32, #tpu.memory_space<vmem>>, vector<1x128x128xf32>
    %12 = vector.shape_cast %11 : vector<1x128x128xf32> to vector<128x128xf32>
    %c1_10 = arith.constant 1 : index
    %c0_11 = arith.constant 0 : index
    %c0_12 = arith.constant 0 : index
    %13 = vector.load %arg3[%c1_10, %c0_11, %c0_12] : memref<3x1x128xf32, #tpu.memory_space<vmem>>, vector<1x1x128xf32>
    %14 = vector.shape_cast %13 : vector<1x1x128xf32> to vector<1x128xf32>
    %cst_13 = arith.constant dense<0.000000e+00> : vector<8x128xf32>
    %15 = tpu.matmul %10, %12, %cst_13 {dimension_numbers = #tpu.dot_dimension_numbers<[1], [0], [0], [1], [0, 0, 1, 1], [], []>} : vector<8x128xf32>, vector<128x128xf32>, vector<8x128xf32> -> vector<8x128xf32>
    %16 = vector.broadcast %14 : vector<1x128xf32> to vector<8x128xf32>
    %17 = arith.addf %15, %16 : vector<8x128xf32>
    %cst_14 = arith.constant 2.000000e-01 : f32
    %18 = vector.broadcast %cst_14 : f32 to vector<8x128xf32>
    %19 = arith.mulf %18, %17 : vector<8x128xf32>
    %20 = arith.maximumf %17, %19 : vector<8x128xf32>
    %c2 = arith.constant 2 : index
    %c0_15 = arith.constant 0 : index
    %c0_16 = arith.constant 0 : index
    %21 = vector.load %arg2[%c2, %c0_15, %c0_16] : memref<3x128x128xf32, #tpu.memory_space<vmem>>, vector<1x128x128xf32>
    %22 = vector.shape_cast %21 : vector<1x128x128xf32> to vector<128x128xf32>
    %c2_17 = arith.constant 2 : index
    %c0_18 = arith.constant 0 : index
    %c0_19 = arith.constant 0 : index
    %23 = vector.load %arg3[%c2_17, %c0_18, %c0_19] : memref<3x1x128xf32, #tpu.memory_space<vmem>>, vector<1x1x128xf32>
    %24 = vector.shape_cast %23 : vector<1x1x128xf32> to vector<1x128xf32>
    %cst_20 = arith.constant dense<0.000000e+00> : vector<8x128xf32>
    %25 = tpu.matmul %20, %22, %cst_20 {dimension_numbers = #tpu.dot_dimension_numbers<[1], [0], [0], [1], [0, 0, 1, 1], [], []>} : vector<8x128xf32>, vector<128x128xf32>, vector<8x128xf32> -> vector<8x128xf32>
    %26 = vector.broadcast %24 : vector<1x128xf32> to vector<8x128xf32>
    %27 = arith.addf %25, %26 : vector<8x128xf32>
    %c0_21 = arith.constant 0 : index
    %c0_22 = arith.constant 0 : index
    %28 = vector.load %arg4[%c0_21, %c0_22] : memref<8x128xf32, #tpu.memory_space<vmem>>, vector<8x128xf32>
    tpu.vector_store %arg4[%c0_21, %c0_22], %27 {strides = array<i32>} : memref<8x128xf32, #tpu.memory_space<vmem>>, vector<8x128xf32>,
    return
  }
  func.func @transform_0(%arg0: i32) -> (i32, i32) {
    %c0_i32 = arith.constant 0 : i32
    %c0_i32_0 = arith.constant 0 : i32
    return %arg0, %c0_i32 : i32, i32
  }
  func.func @transform_1(%arg0: i32) -> (i32, i32, i32) {
    %c0_i32 = arith.constant 0 : i32
    %c0_i32_0 = arith.constant 0 : i32
    %c0_i32_1 = arith.constant 0 : i32
    %c0_i32_2 = arith.constant 0 : i32
    return %c0_i32, %c0_i32_0, %c0_i32_1 : i32, i32, i32
  }
  func.func @transform_2(%arg0: i32) -> (i32, i32, i32) {
    %c0_i32 = arith.constant 0 : i32
    %c0_i32_0 = arith.constant 0 : i32
    %c0_i32_1 = arith.constant 0 : i32
    %c0_i32_2 = arith.constant 0 : i32
    return %c0_i32, %c0_i32_0, %c0_i32_1 : i32, i32, i32
  }
  func.func @transform_3(%arg0: i32) -> (i32, i32) {
    %c0_i32 = arith.constant 0 : i32
    %c0_i32_0 = arith.constant 0 : i32
    return %arg0, %c0_i32 : i32, i32
  }
}

</mosaic_0001>

<llo_original>
// kernel: mlp_forward.1
$region0: #{mlp_forward.1}
  #allocation0 [shape = 'u32[]', space=smem, size = 0x4, offset = 0x4, fixed_abs, tag = 'smem constant byte address 0x4 - core index']
  #allocation1 [shape = 'u32[72,128]{1,0:T(1,128)}', space=vmem, size = 0x9000, scoped, tag = 'internal scratch']
  %s0 = inlined_call_operand.vmem [shape: f32[8,128], index: 0, kind: input, shape index: {}]
  %s1 = inlined_call_operand.hbm [shape: f32[3,128,128], index: 1, kind: input, shape index: {}]
  %s2 = inlined_call_operand.vmem [shape: f32[3,1,128], index: 2, kind: input, shape index: {}]
  %s3 = inlined_call_operand.hbm [shape: f32[8,128], index: 3, kind: output, shape index: {}]
  %s4 = sld [smem:[#allocation0]]
  $region26: #{mlp_forward.1} parent=0
    _
  %s6 = ssub.s32 1, %s4
  %s7 = scalar_select 0, %s6, %s4
  $region1: #{mlp_forward.1} parent=0
    #allocation2 [shape = 'u8[196608]{0}', space=vmem, size = 0x30000, scoped, tag = 'input window, operand 1, single buffered']
    #allocation3 [shape = 's32[1]{0}', space=sflag, size = 0x4, scoped, tag = 'scoped memory for mlp_forward.1']
    #allocation4 [shape = 's32[1]{0}', space=sflag, size = 0x4, scoped, tag = 'scoped memory for mlp_forward.1']
    #allocation5 [shape = 'u8[4096]{0}', space=vmem, size = 0x1000, scoped, tag = 'output window, operand 0, single buffered']
    %8 = vsyncpa [#allocation3], 0
    %9 = vsyncpa [#allocation4], 0
    // Predicated region
    $region2: #{mlp_forward.1} parent=1 // pred_check
      _
    $region3: #{mlp_forward.1} parent=1 // pred_check_branch
      %11 = sbr.rel (0) target = $region5
    $region4: #{mlp_forward.1} parent=1 // pred_region
      _
    $region5: #{mlp_forward.1} parent=1 // pred_fallthru
      _
    // Predicated region
    $region6: #{mlp_forward.1} parent=1 // pred_check
      _
    $region7: #{mlp_forward.1} parent=1 // pred_check_branch
      %13 = sbr.rel (0) target = $region9
    $region8: #{mlp_forward.1} parent=1 // pred_region
      %15 = vsyncadd [#allocation3], 0
      %s16 = sshll.u32 %s1, 4
      %s17 = int_to_ptr.hbm [resolvable:$true] %s16
      %s18 = sshll.u32 [#allocation2], 4
      %s19 = int_to_ptr.vmem [resolvable:$true] %s18
      %24 = dma.hbm_to_vmem [thread:$0]  %s17, 6144, %s19, [#allocation3], 128, 128, 8
    $region9: #{mlp_forward.1} parent=1 // pred_fallthru
      _
    // Predicated region
    $region10: #{mlp_forward.1} parent=1 // pred_check
      _
    $region11: #{mlp_forward.1} parent=1 // pred_check_branch
      %26 = sbr.rel (0) target = $region13
    $region12: #{mlp_forward.1} parent=1 // pred_region
      _
    $region13: #{mlp_forward.1} parent=1 // pred_fallthru
      _
    // Predicated region
    $region14: #{mlp_forward.1} parent=1 // pred_check
      _
    $region15: #{mlp_forward.1} parent=1 // pred_check_branch
      %28 = sbr.rel (0) target = $region17
    $region16: #{mlp_forward.1} parent=1 // pred_region
      %30 = dma.done [#allocation3], 6144
    $region17: #{mlp_forward.1} parent=1 // pred_fallthru
      _
    %v31 = vld [vmem:[%s0] sm:$0xff]
    %v32 = vld [vmem:[#allocation2] sm:$0xff]
    %v33 = vld [vmem:[#allocation2 + $0x8] sm:$0xff]
    %v34 = vld [vmem:[#allocation2 + $0x10] sm:$0xff]
    %v35 = vld [vmem:[#allocation2 + $0x18] sm:$0xff]
    %v36 = vld [vmem:[#allocation2 + $0x20] sm:$0xff]
    %v37 = vld [vmem:[#allocation2 + $0x28] sm:$0xff]
    %v38 = vld [vmem:[#allocation2 + $0x30] sm:$0xff]
    %v39 = vld [vmem:[#allocation2 + $0x38] sm:$0xff]
    %v40 = vld [vmem:[#allocation2 + $0x40] sm:$0xff]
    %v41 = vld [vmem:[#allocation2 + $0x48] sm:$0xff]
    %v42 = vld [vmem:[#allocation2 + $0x50] sm:$0xff]
    %v43 = vld [vmem:[#allocation2 + $0x58] sm:$0xff]
    %v44 = vld [vmem:[#allocation2 + $0x60] sm:$0xff]
    %v45 = vld [vmem:[#allocation2 + $0x68] sm:$0xff]
    %v46 = vld [vmem:[#allocation2 + $0x70] sm:$0xff]
    %v47 = vld [vmem:[#allocation2 + $0x78] sm:$0xff]
    %v48 = vld [vmem:[%s2] sm:$0x1]
    %v50 = vperm.slane %v48, 0
    %52 = vmatpush.msra.mxu0 %v47
    %53 = vmatpush.msra.mxu0 %v46
    %54 = vmatpush.msra.mxu0 %v45
    %55 = vmatpush.msra.mxu0 %v44
    %56 = vmatpush.msra.mxu0 %v43
    %57 = vmatpush.msra.mxu0 %v42
    %58 = vmatpush.msra.mxu0 %v41
    %59 = vmatpush.msra.mxu0 %v40
    %60 = vmatpush.msra.mxu0 %v39
    %61 = vmatpush.msra.mxu0 %v38
    %62 = vmatpush.msra.mxu0 %v37
    %63 = vmatpush.msra.mxu0 %v36
    %64 = vmatpush.msra.mxu0 %v35
    %65 = vmatpush.msra.mxu0 %v34
    %66 = vmatpush.msra.mxu0 %v33
    %67 = vmatpush.msra.mxu0 %v32
    %68 = vmatmul.f32.gmra.mxu0 %v31
    %v69 = vpop.f32.mrf.mxu0
    %v70 = vadd.f32 %v50, %v69
    %71 = vdwg.mxu0
    %v72 = vmul.f32 %v70, 0.2
    %v73 = vmax.f32 %v70, %v72
    %s74 = scalar_lea.vmem [#allocation2], 128
    %v75 = vld [vmem:[%s74] sm:$0xff]
    %v76 = vld [vmem:[%s74 + $0x8] sm:$0xff]
    %v77 = vld [vmem:[%s74 + $0x10] sm:$0xff]
    %v78 = vld [vmem:[%s74 + $0x18] sm:$0xff]
    %v79 = vld [vmem:[%s74 + $0x20] sm:$0xff]
    %v80 = vld [vmem:[%s74 + $0x28] sm:$0xff]
    %v81 = vld [vmem:[%s74 + $0x30] sm:$0xff]
    %v82 = vld [vmem:[%s74 + $0x38] sm:$0xff]
    %v83 = vld [vmem:[%s74 + $0x40] sm:$0xff]
    %v84 = vld [vmem:[%s74 + $0x48] sm:$0xff]
    %v85 = vld [vmem:[%s74 + $0x50] sm:$0xff]
    %v86 = vld [vmem:[%s74 + $0x58] sm:$0xff]
    %v87 = vld [vmem:[%s74 + $0x60] sm:$0xff]
    %v88 = vld [vmem:[%s74 + $0x68] sm:$0xff]
    %v89 = vld [vmem:[%s74 + $0x70] sm:$0xff]
    %v90 = vld [vmem:[%s74 + $0x78] sm:$0xff]
    %s91 = scalar_lea.vmem %s2, 1
    %v92 = vld [vmem:[%s91] sm:$0x1]
    %v94 = vperm.slane %v92, 0
    %96 = vmatpush.msra.mxu0 %v90
    %97 = vmatpush.msra.mxu0 %v89
    %98 = vmatpush.msra.mxu0 %v88
    %99 = vmatpush.msra.mxu0 %v87
    %100 = vmatpush.msra.mxu0 %v86
    %101 = vmatpush.msra.mxu0 %v85
    %102 = vmatpush.msra.mxu0 %v84
    %103 = vmatpush.msra.mxu0 %v83
    %104 = vmatpush.msra.mxu0 %v82
    %105 = vmatpush.msra.mxu0 %v81
    %106 = vmatpush.msra.mxu0 %v80
    %107 = vmatpush.msra.mxu0 %v79
    %108 = vmatpush.msra.mxu0 %v78
    %109 = vmatpush.msra.mxu0 %v77
    %110 = vmatpush.msra.mxu0 %v76
    %111 = vmatpush.msra.mxu0 %v75
    %112 = vmatmul.f32.gmra.mxu0 %v73
    %v113 = vpop.f32.mrf.mxu0
    %v114 = vadd.f32 %v94, %v113
    %115 = vdwg.mxu0
    %v116 = vmul.f32 %v114, 0.2
    %v117 = vmax.f32 %v114, %v116
    %s118 = scalar_lea.vmem [#allocation2], 256
    %v119 = vld [vmem:[%s118] sm:$0xff]
    %v120 = vld [vmem:[%s118 + $0x8] sm:$0xff]
    %v121 = vld [vmem:[%s118 + $0x10] sm:$0xff]
    %v122 = vld [vmem:[%s118 + $0x18] sm:$0xff]
    %v123 = vld [vmem:[%s118 + $0x20] sm:$0xff]
    %v124 = vld [vmem:[%s118 + $0x28] sm:$0xff]
    %v125 = vld [vmem:[%s118 + $0x30] sm:$0xff]
    %v126 = vld [vmem:[%s118 + $0x38] sm:$0xff]
    %v127 = vld [vmem:[%s118 + $0x40] sm:$0xff]
    %v128 = vld [vmem:[%s118 + $0x48] sm:$0xff]
    %v129 = vld [vmem:[%s118 + $0x50] sm:$0xff]
    %v130 = vld [vmem:[%s118 + $0x58] sm:$0xff]
    %v131 = vld [vmem:[%s118 + $0x60] sm:$0xff]
    %v132 = vld [vmem:[%s118 + $0x68] sm:$0xff]
    %v133 = vld [vmem:[%s118 + $0x70] sm:$0xff]
    %v134 = vld [vmem:[%s118 + $0x78] sm:$0xff]
    %s135 = scalar_lea.vmem %s2, 2
    %v136 = vld [vmem:[%s135] sm:$0x1]
    %v138 = vperm.slane %v136, 0
    %140 = vmatpush.msra.mxu0 %v134
    %141 = vmatpush.msra.mxu0 %v133
    %142 = vmatpush.msra.mxu0 %v132
    %143 = vmatpush.msra.mxu0 %v131
    %144 = vmatpush.msra.mxu0 %v130
    %145 = vmatpush.msra.mxu0 %v129
    %146 = vmatpush.msra.mxu0 %v128
    %147 = vmatpush.msra.mxu0 %v127
    %148 = vmatpush.msra.mxu0 %v126
    %149 = vmatpush.msra.mxu0 %v125
    %150 = vmatpush.msra.mxu0 %v124
    %151 = vmatpush.msra.mxu0 %v123
    %152 = vmatpush.msra.mxu0 %v122
    %153 = vmatpush.msra.mxu0 %v121
    %154 = vmatpush.msra.mxu0 %v120
    %155 = vmatpush.msra.mxu0 %v119
    %156 = vmatmul.f32.gmra.mxu0 %v117
    %v157 = vpop.f32.mrf.mxu0
    %v158 = vadd.f32 %v138, %v157
    %159 = vdwg.mxu0
    %160 = vst [vmem:[#allocation5] sm:$0xff] %v158
    // Predicated region
    $region18: #{mlp_forward.1} parent=1 // pred_check
      _
    $region19: #{mlp_forward.1} parent=1 // pred_check_branch
      %162 = sbr.rel (0) target = $region21
    $region20: #{mlp_forward.1} parent=1 // pred_region
      %164 = vsyncadd [#allocation4], 0
      %s166 = sshll.u32 [#allocation5], 4
      %s167 = int_to_ptr.vmem [resolvable:$true] %s166
      %s168 = sshll.u32 %s3, 4
      %s169 = int_to_ptr.hbm [resolvable:$true] %s168
      %171 = dma.vmem_to_hbm [thread:$0]  %s167, 128, %s169, [#allocation4]
    $region21: #{mlp_forward.1} parent=1 // pred_fallthru
      _
    // Predicated region
    $region22: #{mlp_forward.1} parent=1 // pred_check
      _
    $region23: #{mlp_forward.1} parent=1 // pred_check_branch
      %173 = sbr.rel (0) target = $region25
    $region24: #{mlp_forward.1} parent=1 // pred_region
      %175 = dma.done [#allocation4], 128
    $region25: #{mlp_forward.1} parent=1 // pred_fallthru
      _
    %176 = vsyncpa [#allocation3], 1
    %177 = vsyncpa [#allocation4], 1

</llo_original>
